<compile_context>
chip_gen: v5e
topology: v5e:2x2
jax: 0.10.0
libtpu: 0.0.40
codegen_flags: <defaults>
</compile_context>

<pallas_src>
import jax
import jax.numpy as jnp
from jax.experimental import pallas as pl
from jax.experimental.pallas import tpu as pltpu


def _round_up(x, m):
    return (x + m - 1) // m * m


# ----------------------------------------------------------------------------
# Kernel: T LSTM steps with resident weights and resident h/c state.
# grid = (T,), "arbitrary" (sequential recurrence).
# ----------------------------------------------------------------------------
def lstm_seq_kernel(emb_ref, h0_ref, c0_ref, w_ih_ref, w_hh_ref, b_ref,
                    w_l1_ref, b_l1_ref,
                    out_ref, h_out_ref, c_out_ref,
                    h_sc, c_sc):
    t = pl.program_id(0)

    # Initialize resident state from the input h/c on the first step only.
    @pl.when(t == 0)
    def _():
        h_sc[...] = h0_ref[...]
        c_sc[...] = c0_ref[...]

    h = h_sc[...]                      # [B, H]  f32 (state stays f32)
    c = c_sc[...]                      # [B, H]  f32

    # gates = emb @ W_ih + h @ W_hh + (b_ih + b_hh)   -> [B, 4H] f32 accum
    # Two bf16 MXU dots, f32 accumulation; no pack buffer / extra VMEM stores.
    gates = (jnp.dot(emb_ref[...], w_ih_ref[...],
                     preferred_element_type=jnp.float32)
             + jnp.dot(h.astype(jnp.bfloat16), w_hh_ref[...],
                       preferred_element_type=jnp.float32)
             + b_ref[...])

    H = h.shape[-1]                    # multiple of 128 -> lane-aligned slabs
    i_g = jax.nn.sigmoid(gates[:, 0 * H:1 * H])
    f_g = jax.nn.sigmoid(gates[:, 1 * H:2 * H])
    g_g = jnp.tanh(gates[:, 2 * H:3 * H])
    o_g = jax.nn.sigmoid(gates[:, 3 * H:4 * H])

    c_new = f_g * c + i_g * g_g        # all f32 elementwise (VPU)
    h_new = o_g * jnp.tanh(c_new)

    c_sc[...] = c_new
    h_sc[...] = h_new

    # Output projection: [B, H] @ [H, V_pad] + [1, V_pad]  (lane-dense store).
    out_ref[...] = (jnp.dot(h_new.astype(jnp.bfloat16), w_l1_ref[...],
                            preferred_element_type=jnp.float32)
                    + b_l1_ref[...])

    # Write final state back only once, at the last step.
    @pl.when(t == pl.num_programs(0) - 1)
    def _():
        h_out_ref[...] = h_new
        c_out_ref[...] = c_new


# ----------------------------------------------------------------------------
# Wrappers
# ----------------------------------------------------------------------------
def rnn_forward_seq(tokens_bt, hidden, cell, params):
    """Run T LSTM steps in one kernel (equivalent to T calls of RNN.forward).

    tokens_bt: int32 [B, T]
    hidden, cell: float32 [1, B, H]
    returns (logits [B, T, V], hidden [1, B, H], cell [1, B, H])
    """
    B, T = tokens_bt.shape
    H = hidden.shape[-1]
    V = params["vocab_size"]
    V_pad = params["w_l1"].shape[1]
    E_pad = params["embedding"].shape[1]

    h0 = hidden[0]
    c0 = cell[0]
    tokens_tb = tokens_bt.T                                   # [T, B]

    # Pad batch to a multiple of 8 sublanes.
    B_pad = _round_up(max(B, 8), 8)
    if B_pad != B:
        tokens_tb = jnp.pad(tokens_tb, ((0, 0), (0, B_pad - B)))
        h0 = jnp.pad(h0, ((0, B_pad - B), (0, 0)))
        c0 = jnp.pad(c0, ((0, B_pad - B), (0, 0)))

    # Embedding gather stays in JAX glue (per-batch dynamic row gather).
    # Pre-cast to bf16: halves the per-step HBM->VMEM DMA into the kernel.
    emb_seq = jnp.take(params["embedding"], tokens_tb, axis=0
                       ).astype(jnp.bfloat16)                 # [T, B_pad, E_pad]

    grid_spec = pltpu.PrefetchScalarGridSpec(
        num_scalar_prefetch=0,
        grid=(T,),
        in_specs=[
            pl.BlockSpec((None, B_pad, E_pad), lambda t: (t, 0, 0)),   # per-step emb (bf16)
            pl.BlockSpec((B_pad, H), lambda t: (0, 0)),                # h0 (loaded once)
            pl.BlockSpec((B_pad, H), lambda t: (0, 0)),                # c0 (loaded once)
            pl.BlockSpec((E_pad, 4 * H), lambda t: (0, 0)),            # W_ih^T (bf16)
            pl.BlockSpec((H, 4 * H), lambda t: (0, 0)),                # W_hh^T (bf16)
            pl.BlockSpec((1, 4 * H), lambda t: (0, 0)),                # folded gate bias
            pl.BlockSpec((H, V_pad), lambda t: (0, 0)),                # output proj weight
            pl.BlockSpec((1, V_pad), lambda t: (0, 0)),                # output proj bias
        ],
        out_specs=(
            pl.BlockSpec((None, B_pad, V_pad), lambda t: (t, 0, 0)),   # per-step logits
            pl.BlockSpec((B_pad, H), lambda t: (0, 0)),                # final h
            pl.BlockSpec((B_pad, H), lambda t: (0, 0)),                # final c
        ),
        scratch_shapes=[
            pltpu.VMEM((B_pad, H), jnp.float32),    # resident h state
            pltpu.VMEM((B_pad, H), jnp.float32),    # resident c state
        ],
    )

    out_seq, h_new, c_new = pl.pallas_call(
        lstm_seq_kernel,
        out_shape=(
            jax.ShapeDtypeStruct((T, B_pad, V_pad), jnp.float32),
            jax.ShapeDtypeStruct((B_pad, H), jnp.float32),
            jax.ShapeDtypeStruct((B_pad, H), jnp.float32),
        ),
        grid_spec=grid_spec,
        input_output_aliases={1: 1, 2: 2},          # h0 -> h_out, c0 -> c_out in place
        compiler_params=pltpu.CompilerParams(
            dimension_semantics=("arbitrary",)),    # sequential recurrence over T
    )(emb_seq, h0, c0,
      params["w_ih"], params["w_hh"], params["b_gates"],
      params["w_l1"], params["b_l1"])

    logits = jnp.transpose(out_seq[:, :B, :V], (1, 0, 2))      # [B, T, V]
    return logits, h_new[:B][None, ...], c_new[:B][None, ...]


def rnn_forward(x_tokens, hidden, cell, params):
    """Equivalent of RNN.forward (single time step).

    x_tokens: int32 [B]
    hidden, cell: float32 [1, B, H]
    returns (out [B, V], hidden [1, B, H], cell [1, B, H])
    """
    logits, h_new, c_new = rnn_forward_seq(x_tokens[:, None], hidden, cell, params)
    return logits[:, 0, :], h_new, c_new


# ----------------------------------------------------------------------------
# Params / reference
# ----------------------------------------------------------------------------
def init_params(key, vocab_size, embed_dim, rnn_hidden_size):
    if rnn_hidden_size % 128 != 0:
        raise ValueError("rnn_hidden_size must be a multiple of 128 (TPU lane width); "
                         "the reference module uses 512.")
    H = rnn_hidden_size
    E_pad = _round_up(embed_dim, 128)
    V_pad = _round_up(vocab_size, 128)
    ks = jax.random.split(key, 7)
    s = 0.1

    # nn.Embedding(vocab_size, embed_dim), padded to E_pad lanes with zeros.
    emb = s * jax.random.normal(ks[0], (vocab_size, embed_dim), jnp.float32)
    embedding = jnp.zeros((vocab_size, E_pad), jnp.float32).at[:, :embed_dim].set(emb)

    # nn.LSTM weights, PyTorch gate order (i, f, g, o), stored transposed:
    #   W_ih^T : [E_pad, 4H]  (rows beyond embed_dim are zero)
    #   W_hh^T : [H, 4H]
    w_ih = s * jax.random.normal(ks[1], (embed_dim, 4 * H), jnp.float32)
    w_hh = s * jax.random.normal(ks[2], (H, 4 * H), jnp.float32)
    w_ih_pad = jnp.zeros((E_pad, 4 * H), jnp.float32).at[:embed_dim, :].set(w_ih)

    # b_ih + b_hh folded into one [1, 4H] f32 bias.
    b_gates = (s * jax.random.normal(ks[3], (1, 4 * H), jnp.float32)
               + s * jax.random.normal(ks[4], (1, 4 * H), jnp.float32))

    # nn.Linear(H, vocab_size), transposed to [H, V] and padded to V_pad lanes.
    w_l1 = s * jax.random.normal(ks[5], (H, vocab_size), jnp.float32)
    w_l1_pad = jnp.zeros((H, V_pad), jnp.float32).at[:, :vocab_size].set(w_l1)
    b_l1 = s * jax.random.normal(ks[6], (1, vocab_size), jnp.float32)
    b_l1_pad = jnp.zeros((1, V_pad), jnp.float32).at[:, :vocab_size].set(b_l1)

    return {
        "embedding": embedding,
        "w_ih": w_ih_pad.astype(jnp.bfloat16),
        "w_hh": w_hh.astype(jnp.bfloat16),
        "b_gates": b_gates,
        "w_l1": w_l1_pad.astype(jnp.bfloat16),
        "b_l1": b_l1_pad,
        "vocab_size": vocab_size,
        "embed_dim": embed_dim,
        "hidden_size": H,
    }


def init_hidden(batch_size, rnn_hidden_size):
    hidden = jnp.zeros((1, batch_size, rnn_hidden_size), jnp.float32)
    cell = jnp.zeros((1, batch_size, rnn_hidden_size), jnp.float32)
    return hidden, cell


def rnn_forward_seq_ref(tokens_bt, hidden, cell, params):
    """Pure-JAX f32 reference (same weights) for correctness checking."""
    emb_tbl = params["embedding"]
    w_ih = params["w_ih"].astype(jnp.float32)
    w_hh = params["w_hh"].astype(jnp.float32)
    b = params["b_gates"]
    w_l1 = params["w_l1"].astype(jnp.float32)
    b_l1 = params["b_l1"]
    H = hidden.shape[-1]
    V = params["vocab_size"]
    h, c = hidden[0], cell[0]
    outs = []
    for t in range(tokens_bt.shape[1]):
        e = jnp.take(emb_tbl, tokens_bt[:, t], axis=0)
        gates = e @ w_ih + h @ w_hh + b
        i_g = jax.nn.sigmoid(gates[:, 0 * H:1 * H])
        f_g = jax.nn.sigmoid(gates[:, 1 * H:2 * H])
        g_g = jnp.tanh(gates[:, 2 * H:3 * H])
        o_g = jax.nn.sigmoid(gates[:, 3 * H:4 * H])
        c = f_g * c + i_g * g_g
        h = o_g * jnp.tanh(c)
        outs.append(h @ w_l1 + b_l1)
    out = jnp.stack(outs, axis=1)[:, :, :V]
    return out, h[None, ...], c[None, ...]


# ----------------------------------------------------------------------------
# Demo / smoke test
# ----------------------------------------------------------------------------
if __name__ == "__main__":
    vocab_size = 48
    embed_dim = 32
    rnn_hidden_size = 128    # real module uses 512; must be a multiple of 128
    batch = 8
    seq_len = 8

    key = jax.random.PRNGKey(0)
    k_params, k_tok, k_seq = jax.random.split(key, 3)
    params = init_params(k_params, vocab_size, embed_dim, rnn_hidden_size)
    hidden, cell = init_hidden(batch, rnn_hidden_size)

    # --- single-step forward (the module's forward) ---
    x = jax.random.randint(k_tok, (batch,), 0, vocab_size, dtype=jnp.int32)
    out, h1, c1 = rnn_forward(x, hidden, cell, params)
    jax.block_until_ready((out, h1, c1))
    assert out.shape == (batch, vocab_size)
    assert h1.shape == (1, batch, rnn_hidden_size)
    assert c1.shape == (1, batch, rnn_hidden_size)

    # --- multi-step path: in-kernel time loop (== seq_len forward calls) ---
    toks = jax.random.randint(k_seq, (batch, seq_len), 0, vocab_size, dtype=jnp.int32)
    logits, hT, cT = rnn_forward_seq(toks, hidden, cell, params)
    jax.block_until_ready((logits, hT, cT))
    assert logits.shape == (batch, seq_len, vocab_size)

    # Numerical check against a pure-JAX f32 reference (bf16 MXU tolerance).
    logits_ref, hT_ref, cT_ref = rnn_forward_seq_ref(toks, hidden, cell, params)
    assert jnp.allclose(logits, logits_ref, atol=5e-2, rtol=5e-2), \
        float(jnp.max(jnp.abs(logits - logits_ref)))
    assert jnp.allclose(hT, hT_ref, atol=5e-2, rtol=5e-2)
    assert jnp.allclose(cT, cT_ref, atol=5e-2, rtol=5e-2)

    print("KERNEL_OK")
</pallas_src>

<mosaic_0001>
module attributes {stable_mosaic.version = 11 : i64} {
  func.func @lstm_seq_kernel(%arg0: i32, %arg1: memref<1x8x128xbf16, #tpu.memory_space<vmem>>, %arg2: memref<8x128xf32, #tpu.memory_space<vmem>>, %arg3: memref<8x128xf32, #tpu.memory_space<vmem>>, %arg4: memref<128x512xbf16, #tpu.memory_space<vmem>>, %arg5: memref<128x512xbf16, #tpu.memory_space<vmem>>, %arg6: memref<1x512xf32, #tpu.memory_space<vmem>>, %arg7: memref<128x128xbf16, #tpu.memory_space<vmem>>, %arg8: memref<1x128xf32, #tpu.memory_space<vmem>>, %arg9: memref<1x8x128xf32, #tpu.memory_space<vmem>>, %arg10: memref<8x128xf32, #tpu.memory_space<vmem>>, %arg11: memref<8x128xf32, #tpu.memory_space<vmem>>, %arg12: memref<8x128xf32, #tpu.memory_space<vmem>>, %arg13: memref<8x128xf32, #tpu.memory_space<vmem>>) attributes {dimension_semantics = [#tpu.dimension_semantics<arbitrary>], iteration_bounds = array<i64: 1>, scalar_prefetch = 0 : i64, scratch_operands = 2 : i64, tpu.core_type = #tpu.core_type<tc>, window_params = [{transform_indices = @transform_0, window_bounds = array<i64: 1, 8, 128>}, {pipeline_mode = #tpu.pipeline_mode<synchronous>, transform_indices = @transform_1, window_bounds = array<i64: 8, 128>}, {pipeline_mode = #tpu.pipeline_mode<synchronous>, transform_indices = @transform_2, window_bounds = array<i64: 8, 128>}, {pipeline_mode = #tpu.pipeline_mode<synchronous>, transform_indices = @transform_3, window_bounds = array<i64: 128, 512>}, {pipeline_mode = #tpu.pipeline_mode<synchronous>, transform_indices = @transform_4, window_bounds = array<i64: 128, 512>}, {pipeline_mode = #tpu.pipeline_mode<synchronous>, transform_indices = @transform_5, window_bounds = array<i64: 1, 512>}, {pipeline_mode = #tpu.pipeline_mode<synchronous>, transform_indices = @transform_6, window_bounds = array<i64: 128, 128>}, {pipeline_mode = #tpu.pipeline_mode<synchronous>, transform_indices = @transform_7, window_bounds = array<i64: 1, 128>}, {transform_indices = @transform_8, window_bounds = array<i64: 1, 8, 128>}, {pipeline_mode = #tpu.pipeline_mode<synchronous>, transform_indices = @transform_9, window_bounds = array<i64: 8, 128>}, {pipeline_mode = #tpu.pipeline_mode<synchronous>, transform_indices = @transform_10, window_bounds = array<i64: 8, 128>}]} {
    %c0_i32 = arith.constant 0 : i32
    %0 = arith.cmpi eq, %arg0, %c0_i32 : i32
    %1 = arith.extui %0 : i1 to i32
    %c0_i32_0 = arith.constant 0 : i32
    %2 = arith.cmpi ne, %1, %c0_i32_0 : i32
    scf.if %2 {
      %c0_31 = arith.constant 0 : index
      %c0_32 = arith.constant 0 : index
      %55 = vector.load %arg2[%c0_31, %c0_32] : memref<8x128xf32, #tpu.memory_space<vmem>>, vector<8x128xf32>
      %c0_33 = arith.constant 0 : index
      %c0_34 = arith.constant 0 : index
      %56 = vector.load %arg12[%c0_33, %c0_34] : memref<8x128xf32, #tpu.memory_space<vmem>>, vector<8x128xf32>
      tpu.vector_store %arg12[%c0_33, %c0_34], %55 {strides = array<i32>} : memref<8x128xf32, #tpu.memory_space<vmem>>, vector<8x128xf32>,
      %c0_35 = arith.constant 0 : index
      %c0_36 = arith.constant 0 : index
      %57 = vector.load %arg3[%c0_35, %c0_36] : memref<8x128xf32, #tpu.memory_space<vmem>>, vector<8x128xf32>
      %c0_37 = arith.constant 0 : index
      %c0_38 = arith.constant 0 : index
      %58 = vector.load %arg13[%c0_37, %c0_38] : memref<8x128xf32, #tpu.memory_space<vmem>>, vector<8x128xf32>
      tpu.vector_store %arg13[%c0_37, %c0_38], %57 {strides = array<i32>} : memref<8x128xf32, #tpu.memory_space<vmem>>, vector<8x128xf32>,
    } else {
    }
    %c0 = arith.constant 0 : index
    %c0_1 = arith.constant 0 : index
    %3 = vector.load %arg12[%c0, %c0_1] : memref<8x128xf32, #tpu.memory_space<vmem>>, vector<8x128xf32>
    %c0_2 = arith.constant 0 : index
    %c0_3 = arith.constant 0 : index
    %4 = vector.load %arg13[%c0_2, %c0_3] : memref<8x128xf32, #tpu.memory_space<vmem>>, vector<8x128xf32>
    %c0_4 = arith.constant 0 : index
    %c0_5 = arith.constant 0 : index
    %c0_6 = arith.constant 0 : index
    %5 = vector.load %arg1[%c0_4, %c0_5, %c0_6] : memref<1x8x128xbf16, #tpu.memory_space<vmem>>, vector<1x8x128xbf16>
    %6 = vector.shape_cast %5 : vector<1x8x128xbf16> to vector<8x128xbf16>
    %c0_7 = arith.constant 0 : index
    %c0_8 = arith.constant 0 : index
    %7 = vector.load %arg4[%c0_7, %c0_8] : memref<128x512xbf16, #tpu.memory_space<vmem>>, vector<128x512xbf16>
    %cst = arith.constant dense<0.000000e+00> : vector<8x512xf32>
    %8 = tpu.matmul %6, %7, %cst {dimension_numbers = #tpu.dot_dimension_numbers<[1], [0], [0], [1], [0, 0, 1, 1], [], []>} : vector<8x128xbf16>, vector<128x512xbf16>, vector<8x512xf32> -> vector<8x512xf32>
    %9 = arith.truncf %3 : vector<8x128xf32> to vector<8x128xbf16>
    %c0_9 = arith.constant 0 : index
    %c0_10 = arith.constant 0 : index
    %10 = vector.load %arg5[%c0_9, %c0_10] : memref<128x512xbf16, #tpu.memory_space<vmem>>, vector<128x512xbf16>
    %cst_11 = arith.constant dense<0.000000e+00> : vector<8x512xf32>
    %11 = tpu.matmul %9, %10, %cst_11 {dimension_numbers = #tpu.dot_dimension_numbers<[1], [0], [0], [1], [0, 0, 1, 1], [], []>} : vector<8x128xbf16>, vector<128x512xbf16>, vector<8x512xf32> -> vector<8x512xf32>
    %12 = arith.addf %8, %11 : vector<8x512xf32>
    %c0_12 = arith.constant 0 : index
    %c0_13 = arith.constant 0 : index
    %13 = vector.load %arg6[%c0_12, %c0_13] : memref<1x512xf32, #tpu.memory_space<vmem>>, vector<1x512xf32>
    %14 = vector.broadcast %13 : vector<1x512xf32> to vector<8x512xf32>
    %15 = arith.addf %12, %14 : vector<8x512xf32>
    %16 = vector.extract_strided_slice %15 {offsets = [0, 0], sizes = [8, 128], strides = [1, 1]} : vector<8x512xf32> to vector<8x128xf32>
    %17 = arith.negf %16 : vector<8x128xf32>
    %18 = math.exp %17 : vector<8x128xf32>
    %cst_14 = arith.constant 1.000000e+00 : f32
    %19 = vector.broadcast %cst_14 : f32 to vector<8x128xf32>
    %20 = arith.addf %19, %18 : vector<8x128xf32>
    %21 = arith.divf %19, %20 : vector<8x128xf32>
    %22 = vector.extract_strided_slice %15 {offsets = [0, 128], sizes = [8, 128], strides = [1, 1]} : vector<8x512xf32> to vector<8x128xf32>
    %23 = arith.negf %22 : vector<8x128xf32>
    %24 = math.exp %23 : vector<8x128xf32>
    %cst_15 = arith.constant 1.000000e+00 : f32
    %25 = vector.broadcast %cst_15 : f32 to vector<8x128xf32>
    %26 = arith.addf %25, %24 : vector<8x128xf32>
    %27 = arith.divf %25, %26 : vector<8x128xf32>
    %28 = vector.extract_strided_slice %15 {offsets = [0, 256], sizes = [8, 128], strides = [1, 1]} : vector<8x512xf32> to vector<8x128xf32>
    %29 = math.tanh %28 : vector<8x128xf32>
    %30 = vector.extract_strided_slice %15 {offsets = [0, 384], sizes = [8, 128], strides = [1, 1]} : vector<8x512xf32> to vector<8x128xf32>
    %31 = arith.negf %30 : vector<8x128xf32>
    %32 = math.exp %31 : vector<8x128xf32>
    %cst_16 = arith.constant 1.000000e+00 : f32
    %33 = vector.broadcast %cst_16 : f32 to vector<8x128xf32>
    %34 = arith.addf %33, %32 : vector<8x128xf32>
    %35 = arith.divf %33, %34 : vector<8x128xf32>
    %36 = arith.mulf %27, %4 : vector<8x128xf32>
    %37 = arith.mulf %21, %29 : vector<8x128xf32>
    %38 = arith.addf %36, %37 : vector<8x128xf32>
    %39 = math.tanh %38 : vector<8x128xf32>
    %40 = arith.mulf %35, %39 : vector<8x128xf32>
    %c0_17 = arith.constant 0 : index
    %c0_18 = arith.constant 0 : index
    %41 = vector.load %arg13[%c0_17, %c0_18] : memref<8x128xf32, #tpu.memory_space<vmem>>, vector<8x128xf32>
    tpu.vector_store %arg13[%c0_17, %c0_18], %38 {strides = array<i32>} : memref<8x128xf32, #tpu.memory_space<vmem>>, vector<8x128xf32>,
    %c0_19 = arith.constant 0 : index
    %c0_20 = arith.constant 0 : index
    %42 = vector.load %arg12[%c0_19, %c0_20] : memref<8x128xf32, #tpu.memory_space<vmem>>, vector<8x128xf32>
    tpu.vector_store %arg12[%c0_19, %c0_20], %40 {strides = array<i32>} : memref<8x128xf32, #tpu.memory_space<vmem>>, vector<8x128xf32>,
    %43 = arith.truncf %40 : vector<8x128xf32> to vector<8x128xbf16>
    %c0_21 = arith.constant 0 : index
    %c0_22 = arith.constant 0 : index
    %44 = vector.load %arg7[%c0_21, %c0_22] : memref<128x128xbf16, #tpu.memory_space<vmem>>, vector<128x128xbf16>
    %cst_23 = arith.constant dense<0.000000e+00> : vector<8x128xf32>
    %45 = tpu.matmul %43, %44, %cst_23 {dimension_numbers = #tpu.dot_dimension_numbers<[1], [0], [0], [1], [0, 0, 1, 1], [], []>} : vector<8x128xbf16>, vector<128x128xbf16>, vector<8x128xf32> -> vector<8x128xf32>
    %c0_24 = arith.constant 0 : index
    %c0_25 = arith.constant 0 : index
    %46 = vector.load %arg8[%c0_24, %c0_25] : memref<1x128xf32, #tpu.memory_space<vmem>>, vector<1x128xf32>
    %47 = vector.broadcast %46 : vector<1x128xf32> to vector<8x128xf32>
    %48 = arith.addf %45, %47 : vector<8x128xf32>
    %c0_26 = arith.constant 0 : index
    %c0_27 = arith.constant 0 : index
    %c0_28 = arith.constant 0 : index
    %49 = vector.load %arg9[%c0_26, %c0_27, %c0_28] : memref<1x8x128xf32, #tpu.memory_space<vmem>>, vector<1x8x128xf32>
    %50 = vector.shape_cast %49 : vector<1x8x128xf32> to vector<8x128xf32>
    %51 = vector.shape_cast %48 : vector<8x128xf32> to vector<1x8x128xf32>
    tpu.vector_store %arg9[%c0_26, %c0_27, %c0_28], %51 {strides = array<i32>} : memref<1x8x128xf32, #tpu.memory_space<vmem>>, vector<1x8x128xf32>,
    %c0_i32_29 = arith.constant 0 : i32
    %52 = arith.cmpi eq, %arg0, %c0_i32_29 : i32
    %53 = arith.extui %52 : i1 to i32
    %c0_i32_30 = arith.constant 0 : i32
    %54 = arith.cmpi ne, %53, %c0_i32_30 : i32
    scf.if %54 {
      %c0_31 = arith.constant 0 : index
      %c0_32 = arith.constant 0 : index
      %55 = vector.load %arg10[%c0_31, %c0_32] : memref<8x128xf32, #tpu.memory_space<vmem>>, vector<8x128xf32>
      tpu.vector_store %arg10[%c0_31, %c0_32], %40 {strides = array<i32>} : memref<8x128xf32, #tpu.memory_space<vmem>>, vector<8x128xf32>,
      %c0_33 = arith.constant 0 : index
      %c0_34 = arith.constant 0 : index
      %56 = vector.load %arg11[%c0_33, %c0_34] : memref<8x128xf32, #tpu.memory_space<vmem>>, vector<8x128xf32>
      tpu.vector_store %arg11[%c0_33, %c0_34], %38 {strides = array<i32>} : memref<8x128xf32, #tpu.memory_space<vmem>>, vector<8x128xf32>,
    } else {
    }
    return
  }
  func.func @transform_0(%arg0: i32) -> (i32, i32, i32) {
    %c0_i32 = arith.constant 0 : i32
    %c0_i32_0 = arith.constant 0 : i32
    %c0_i32_1 = arith.constant 0 : i32
    return %arg0, %c0_i32, %c0_i32_0 : i32, i32, i32
  }
  func.func @transform_1(%arg0: i32) -> (i32, i32) {
    %c0_i32 = arith.constant 0 : i32
    %c0_i32_0 = arith.constant 0 : i32
    %c0_i32_1 = arith.constant 0 : i32
    return %c0_i32, %c0_i32_0 : i32, i32
  }
  func.func @transform_2(%arg0: i32) -> (i32, i32) {
    %c0_i32 = arith.constant 0 : i32
    %c0_i32_0 = arith.constant 0 : i32
    %c0_i32_1 = arith.constant 0 : i32
    return %c0_i32, %c0_i32_0 : i32, i32
  }
  func.func @transform_3(%arg0: i32) -> (i32, i32) {
    %c0_i32 = arith.constant 0 : i32
    %c0_i32_0 = arith.constant 0 : i32
    %c0_i32_1 = arith.constant 0 : i32
    return %c0_i32, %c0_i32_0 : i32, i32
  }
  func.func @transform_4(%arg0: i32) -> (i32, i32) {
    %c0_i32 = arith.constant 0 : i32
    %c0_i32_0 = arith.constant 0 : i32
    %c0_i32_1 = arith.constant 0 : i32
    return %c0_i32, %c0_i32_0 : i32, i32
  }
  func.func @transform_5(%arg0: i32) -> (i32, i32) {
    %c0_i32 = arith.constant 0 : i32
    %c0_i32_0 = arith.constant 0 : i32
    %c0_i32_1 = arith.constant 0 : i32
    return %c0_i32, %c0_i32_0 : i32, i32
  }
  func.func @transform_6(%arg0: i32) -> (i32, i32) {
    %c0_i32 = arith.constant 0 : i32
    %c0_i32_0 = arith.constant 0 : i32
    %c0_i32_1 = arith.constant 0 : i32
    return %c0_i32, %c0_i32_0 : i32, i32
  }
  func.func @transform_7(%arg0: i32) -> (i32, i32) {
    %c0_i32 = arith.constant 0 : i32
    %c0_i32_0 = arith.constant 0 : i32
    %c0_i32_1 = arith.constant 0 : i32
    return %c0_i32, %c0_i32_0 : i32, i32
  }
  func.func @transform_8(%arg0: i32) -> (i32, i32, i32) {
    %c0_i32 = arith.constant 0 : i32
    %c0_i32_0 = arith.constant 0 : i32
    %c0_i32_1 = arith.constant 0 : i32
    return %arg0, %c0_i32, %c0_i32_0 : i32, i32, i32
  }
  func.func @transform_9(%arg0: i32) -> (i32, i32) {
    %c0_i32 = arith.constant 0 : i32
    %c0_i32_0 = arith.constant 0 : i32
    %c0_i32_1 = arith.constant 0 : i32
    return %c0_i32, %c0_i32_0 : i32, i32
  }
  func.func @transform_10(%arg0: i32) -> (i32, i32) {
    %c0_i32 = arith.constant 0 : i32
    %c0_i32_0 = arith.constant 0 : i32
    %c0_i32_1 = arith.constant 0 : i32
    return %c0_i32, %c0_i32_0 : i32, i32
  }
}

</mosaic_0001>

<llo_original>
// kernel: tpu_custom_call.1
$region0: #{tpu_custom_call.1}
  #allocation0 [shape = 'u32[]', space=smem, size = 0x4, offset = 0x4, fixed_abs, tag = 'smem constant byte address 0x4 - core index']
  #allocation1 [shape = 'u32[72,128]{1,0:T(1,128)}', space=vmem, size = 0x9000, scoped, tag = 'internal scratch']
  #allocation2 [shape = 'f32[8,128]{1,0:T(8,128)}', space=vmem, size = 0x1000, scoped, tag = 'scratch operand']
  #allocation3 [shape = 'f32[8,128]{1,0:T(8,128)}', space=vmem, size = 0x1000, scoped, tag = 'scratch operand']
  %s0 = inlined_call_operand.vmem [shape: bf16[1,8,128], index: 0, kind: input, shape index: {}]
  %s1 = inlined_call_operand.hbm [shape: f32[8,128], index: 1, kind: input, shape index: {}, may-alias: {1,9}]
  %s2 = inlined_call_operand.hbm [shape: f32[8,128], index: 2, kind: input, shape index: {}, may-alias: {2,10}]
  %s3 = inlined_call_operand.hbm [shape: bf16[128,512], index: 3, kind: input, shape index: {}]
  %s4 = inlined_call_operand.hbm [shape: bf16[128,512], index: 4, kind: input, shape index: {}]
  %s5 = inlined_call_operand.vmem [shape: f32[1,512], index: 5, kind: input, shape index: {}]
  %s6 = inlined_call_operand.hbm [shape: bf16[128,128], index: 6, kind: input, shape index: {}]
  %s7 = inlined_call_operand.vmem [shape: f32[1,128], index: 7, kind: input, shape index: {}]
  %s8 = inlined_call_operand.hbm [shape: f32[1,8,128], index: 8, kind: output, shape index: {0}]
  %s9 = inlined_call_operand.hbm [shape: f32[8,128], index: 9, kind: output, shape index: {1}, may-alias: {1,9}]
  %s10 = inlined_call_operand.hbm [shape: f32[8,128], index: 10, kind: output, shape index: {2}, may-alias: {2,10}]
  %11 = xla_tuple %s8, %s9, %s10
  %s12 = sld [smem:[#allocation0]]
  $region86: #{tpu_custom_call.1} parent=0
    _
  %s14 = ssub.s32 1, %s12
  %s15 = scalar_select 0, %s14, %s12
  $region1: #{tpu_custom_call.1} parent=0
    #allocation4 [shape = 'u8[4096]{0}', space=vmem, size = 0x1000, scoped, tag = 'input window, operand 1, single buffered']
    #allocation5 [shape = 's32[1]{0}', space=sflag, size = 0x4, scoped, tag = 'scoped memory for tpu_custom_call.1']
    #allocation6 [shape = 's32[1]{0}', space=sflag, size = 0x4, scoped, tag = 'scoped memory for tpu_custom_call.1']
    #allocation7 [shape = 'u8[4096]{0}', space=vmem, size = 0x1000, scoped, tag = 'input window, operand 2, single buffered']
    #allocation8 [shape = 's32[1]{0}', space=sflag, size = 0x4, scoped, tag = 'scoped memory for tpu_custom_call.1']
    #allocation9 [shape = 'u8[131072]{0}', space=vmem, size = 0x20000, scoped, tag = 'input window, operand 3, single buffered']
    #allocation10 [shape = 'u8[131072]{0}', space=vmem, size = 0x20000, scoped, tag = 'input window, operand 4, single buffered']
    #allocation11 [shape = 's32[1]{0}', space=sflag, size = 0x4, scoped, tag = 'scoped memory for tpu_custom_call.1']
    #allocation12 [shape = 'u8[32768]{0}', space=vmem, size = 0x8000, scoped, tag = 'input window, operand 6, single buffered']
    #allocation13 [shape = 'u8[4096]{0}', space=vmem, size = 0x1000, scoped, tag = 'output window, operand 0, single buffered']
    #allocation14 [shape = 'u8[4096]{0}', space=vmem, size = 0x1000, scoped, tag = 'output window, operand 1, single buffered']
    #allocation15 [shape = 's32[1]{0}', space=sflag, size = 0x4, scoped, tag = 'scoped memory for tpu_custom_call.1']
    #allocation16 [shape = 'u8[4096]{0}', space=vmem, size = 0x1000, scoped, tag = 'output window, operand 2, single buffered']
    %16 = vsyncpa [#allocation5], 0
    %17 = vsyncpa [#allocation8], 0
    %18 = vsyncpa [#allocation11], 0
    %19 = vsyncpa [#allocation6], 0
    %20 = vsyncpa [#allocation15], 0
    // Predicated region
    $region2: #{tpu_custom_call.1} parent=1 // pred_check
      _
    $region3: #{tpu_custom_call.1} parent=1 // pred_check_branch
      %22 = sbr.rel (0) target = $region5
    $region4: #{tpu_custom_call.1} parent=1 // pred_region
      _
    $region5: #{tpu_custom_call.1} parent=1 // pred_fallthru
      _
    // Predicated region
    $region6: #{tpu_custom_call.1} parent=1 // pred_check
      _
    $region7: #{tpu_custom_call.1} parent=1 // pred_check_branch
      %24 = sbr.rel (0) target = $region9
    $region8: #{tpu_custom_call.1} parent=1 // pred_region
      %26 = vsyncadd [#allocation5], 0
      %s28 = sshll.u32 %s1, 4
      %s29 = int_to_ptr.hbm [resolvable:$true] %s28
      %s30 = sshll.u32 [#allocation4], 4
      %s31 = int_to_ptr.vmem [resolvable:$true] %s30
      %33 = dma.hbm_to_vmem [thread:$0]  %s29, 128, %s31, [#allocation5]
    $region9: #{tpu_custom_call.1} parent=1 // pred_fallthru
      _
    // Predicated region
    $region10: #{tpu_custom_call.1} parent=1 // pred_check
      _
    $region11: #{tpu_custom_call.1} parent=1 // pred_check_branch
      %35 = sbr.rel (0) target = $region13
    $region12: #{tpu_custom_call.1} parent=1 // pred_region
      %37 = vsyncadd [#allocation8], 0
      %s39 = sshll.u32 %s2, 4
      %s40 = int_to_ptr.hbm [resolvable:$true] %s39
      %s41 = sshll.u32 [#allocation7], 4
      %s42 = int_to_ptr.vmem [resolvable:$true] %s41
      %44 = dma.hbm_to_vmem [thread:$0]  %s40, 128, %s42, [#allocation8]
    $region13: #{tpu_custom_call.1} parent=1 // pred_fallthru
      _
    // Predicated region
    $region14: #{tpu_custom_call.1} parent=1 // pred_check
      _
    $region15: #{tpu_custom_call.1} parent=1 // pred_check_branch
      %46 = sbr.rel (0) target = $region17
    $region16: #{tpu_custom_call.1} parent=1 // pred_region
      %48 = vsyncadd [#allocation8], 0
      %s49 = sshll.u32 %s3, 4
      %s50 = int_to_ptr.hbm [resolvable:$true] %s49
      %s51 = sshll.u32 [#allocation9], 4
      %s52 = int_to_ptr.vmem [resolvable:$true] %s51
      %57 = dma.hbm_to_vmem [thread:$0]  %s50, 4096, %s52, [#allocation8], 256, 256, 16
    $region17: #{tpu_custom_call.1} parent=1 // pred_fallthru
      _
    // Predicated region
    $region18: #{tpu_custom_call.1} parent=1 // pred_check
      _
    $region19: #{tpu_custom_call.1} parent=1 // pred_check_branch
      %59 = sbr.rel (0) target = $region21
    $region20: #{tpu_custom_call.1} parent=1 // pred_region
      %61 = vsyncadd [#allocation11], 0
      %s62 = sshll.u32 %s4, 4
      %s63 = int_to_ptr.hbm [resolvable:$true] %s62
      %s64 = sshll.u32 [#allocation10], 4
      %s65 = int_to_ptr.vmem [resolvable:$true] %s64
      %70 = dma.hbm_to_vmem [thread:$0]  %s63, 4096, %s65, [#allocation11], 256, 256, 16
    $region21: #{tpu_custom_call.1} parent=1 // pred_fallthru
      _
    // Predicated region
    $region22: #{tpu_custom_call.1} parent=1 // pred_check
      _
    $region23: #{tpu_custom_call.1} parent=1 // pred_check_branch
      %72 = sbr.rel (0) target = $region25
    $region24: #{tpu_custom_call.1} parent=1 // pred_region
      _
    $region25: #{tpu_custom_call.1} parent=1 // pred_fallthru
      _
    // Predicated region
    $region26: #{tpu_custom_call.1} parent=1 // pred_check
      _
    $region27: #{tpu_custom_call.1} parent=1 // pred_check_branch
      %74 = sbr.rel (0) target = $region29
    $region28: #{tpu_custom_call.1} parent=1 // pred_region
      %76 = vsyncadd [#allocation11], 0
      %s77 = sshll.u32 %s6, 4
      %s78 = int_to_ptr.hbm [resolvable:$true] %s77
      %s79 = sshll.u32 [#allocation12], 4
      %s80 = int_to_ptr.vmem [resolvable:$true] %s79
      %85 = dma.hbm_to_vmem [thread:$0]  %s78, 1024, %s80, [#allocation11], 64, 64, 4
    $region29: #{tpu_custom_call.1} parent=1 // pred_fallthru
      _
    // Predicated region
    $region30: #{tpu_custom_call.1} parent=1 // pred_check
      _
    $region31: #{tpu_custom_call.1} parent=1 // pred_check_branch
      %87 = sbr.rel (0) target = $region33
    $region32: #{tpu_custom_call.1} parent=1 // pred_region
      _
    $region33: #{tpu_custom_call.1} parent=1 // pred_fallthru
      _
    // Predicated region
    $region34: #{tpu_custom_call.1} parent=1 // pred_check
      _
    $region35: #{tpu_custom_call.1} parent=1 // pred_check_branch
      %89 = sbr.rel (0) target = $region37
    $region36: #{tpu_custom_call.1} parent=1 // pred_region
      %91 = dma.done [#allocation5], 128
    $region37: #{tpu_custom_call.1} parent=1 // pred_fallthru
      _
    // Predicated region
    $region38: #{tpu_custom_call.1} parent=1 // pred_check
      _
    $region39: #{tpu_custom_call.1} parent=1 // pred_check_branch
      %93 = sbr.rel (0) target = $region41
    $region40: #{tpu_custom_call.1} parent=1 // pred_region
      %95 = dma.done [#allocation8], 128
    $region41: #{tpu_custom_call.1} parent=1 // pred_fallthru
      _
    // Predicated region
    $region42: #{tpu_custom_call.1} parent=1 // pred_check
      _
    $region43: #{tpu_custom_call.1} parent=1 // pred_check_branch
      %97 = sbr.rel (0) target = $region45
    $region44: #{tpu_custom_call.1} parent=1 // pred_region
      %99 = dma.done [#allocation8], 4096
    $region45: #{tpu_custom_call.1} parent=1 // pred_fallthru
      _
    // Predicated region
    $region46: #{tpu_custom_call.1} parent=1 // pred_check
      _
    $region47: #{tpu_custom_call.1} parent=1 // pred_check_branch
      %101 = sbr.rel (0) target = $region49
    $region48: #{tpu_custom_call.1} parent=1 // pred_region
      %103 = dma.done [#allocation11], 4096
    $region49: #{tpu_custom_call.1} parent=1 // pred_fallthru
      _
    // Predicated region
    $region50: #{tpu_custom_call.1} parent=1 // pred_check
      _
    $region51: #{tpu_custom_call.1} parent=1 // pred_check_branch
      %105 = sbr.rel (0) target = $region53
    $region52: #{tpu_custom_call.1} parent=1 // pred_region
      %107 = dma.done [#allocation11], 1024
    $region53: #{tpu_custom_call.1} parent=1 // pred_fallthru
      _
    %p108 = scmp.eq.s32.totalorder 0, 0
    // Predicated region
    $region54: #{tpu_custom_call.1} parent=1 // pred_check
      %p109 = pneg %p108
    $region55: #{tpu_custom_call.1} parent=1 // pred_check_branch
      %111 = sbr.rel (%p109) target = $region57
    $region56: #{tpu_custom_call.1} parent=1 // pred_region
      %v112 = vld [vmem:[#allocation4] sm:$0xff]
      %113 = vst [vmem:[#allocation2] sm:$0xff] %v112
      %v114 = vld [vmem:[#allocation7] sm:$0xff]
      %115 = vst [vmem:[#allocation3] sm:$0xff] %v114
    $region57: #{tpu_custom_call.1} parent=1 // pred_fallthru
      _
    %v116 = vld [vmem:[#allocation2] sm:$0xff]
    %v117 = vld [vmem:[#allocation3] sm:$0xff]
    %v118 = vld [vmem:[%s0] sm:$0xf]
    %v119 = vld [vmem:[#allocation9] sm:$0xff]
    %v120 = vld [vmem:[#allocation9 + $0x8] sm:$0xff]
    %v121 = vld [vmem:[#allocation9 + $0x10] sm:$0xff]
    %v122 = vld [vmem:[#allocation9 + $0x18] sm:$0xff]
    %v123 = vld [vmem:[#allocation9 + $0x20] sm:$0xff]
    %v124 = vld [vmem:[#allocation9 + $0x28] sm:$0xff]
    %v125 = vld [vmem:[#allocation9 + $0x30] sm:$0xff]
    %v126 = vld [vmem:[#allocation9 + $0x38] sm:$0xff]
    %v127 = vld [vmem:[#allocation9 + $0x40] sm:$0xff]
    %v128 = vld [vmem:[#allocation9 + $0x48] sm:$0xff]
    %v129 = vld [vmem:[#allocation9 + $0x50] sm:$0xff]
    %v130 = vld [vmem:[#allocation9 + $0x58] sm:$0xff]
    %v131 = vld [vmem:[#allocation9 + $0x60] sm:$0xff]
    %v132 = vld [vmem:[#allocation9 + $0x68] sm:$0xff]
    %v133 = vld [vmem:[#allocation9 + $0x70] sm:$0xff]
    %v134 = vld [vmem:[#allocation9 + $0x78] sm:$0xff]
    %v135 = vld [vmem:[#allocation9 + $0x80] sm:$0xff]
    %v136 = vld [vmem:[#allocation9 + $0x88] sm:$0xff]
    %v137 = vld [vmem:[#allocation9 + $0x90] sm:$0xff]
    %v138 = vld [vmem:[#allocation9 + $0x98] sm:$0xff]
    %v139 = vld [vmem:[#allocation9 + $0xa0] sm:$0xff]
    %v140 = vld [vmem:[#allocation9 + $0xa8] sm:$0xff]
    %v141 = vld [vmem:[#allocation9 + $0xb0] sm:$0xff]
    %v142 = vld [vmem:[#allocation9 + $0xb8] sm:$0xff]
    %v143 = vld [vmem:[#allocation9 + $0xc0] sm:$0xff]
    %v144 = vld [vmem:[#allocation9 + $0xc8] sm:$0xff]
    %v145 = vld [vmem:[#allocation9 + $0xd0] sm:$0xff]
    %v146 = vld [vmem:[#allocation9 + $0xd8] sm:$0xff]
    %v147 = vld [vmem:[#allocation9 + $0xe0] sm:$0xff]
    %v148 = vld [vmem:[#allocation9 + $0xe8] sm:$0xff]
    %v149 = vld [vmem:[#allocation9 + $0xf0] sm:$0xff]
    %v150 = vld [vmem:[#allocation9 + $0xf8] sm:$0xff]
    %v151 = vpack.c.bf16 %v116, %v116
    %v152 = vld [vmem:[#allocation10] sm:$0xff]
    %v153 = vld [vmem:[#allocation10 + $0x8] sm:$0xff]
    %v154 = vld [vmem:[#allocation10 + $0x10] sm:$0xff]
    %v155 = vld [vmem:[#allocation10 + $0x18] sm:$0xff]
    %v156 = vld [vmem:[#allocation10 + $0x20] sm:$0xff]
    %v157 = vld [vmem:[#allocation10 + $0x28] sm:$0xff]
    %v158 = vld [vmem:[#allocation10 + $0x30] sm:$0xff]
    %v159 = vld [vmem:[#allocation10 + $0x38] sm:$0xff]
    %v160 = vld [vmem:[#allocation10 + $0x40] sm:$0xff]
    %v161 = vld [vmem:[#allocation10 + $0x48] sm:$0xff]
    %v162 = vld [vmem:[#allocation10 + $0x50] sm:$0xff]
    %v163 = vld [vmem:[#allocation10 + $0x58] sm:$0xff]
    %v164 = vld [vmem:[#allocation10 + $0x60] sm:$0xff]
    %v165 = vld [vmem:[#allocation10 + $0x68] sm:$0xff]
    %v166 = vld [vmem:[#allocation10 + $0x70] sm:$0xff]
    %v167 = vld [vmem:[#allocation10 + $0x78] sm:$0xff]
    %v168 = vld [vmem:[#allocation10 + $0x80] sm:$0xff]
    %v169 = vld [vmem:[#allocation10 + $0x88] sm:$0xff]
    %v170 = vld [vmem:[#allocation10 + $0x90] sm:$0xff]
    %v171 = vld [vmem:[#allocation10 + $0x98] sm:$0xff]
    %v172 = vld [vmem:[#allocation10 + $0xa0] sm:$0xff]
    %v173 = vld [vmem:[#allocation10 + $0xa8] sm:$0xff]
    %v174 = vld [vmem:[#allocation10 + $0xb0] sm:$0xff]
    %v175 = vld [vmem:[#allocation10 + $0xb8] sm:$0xff]
    %v176 = vld [vmem:[#allocation10 + $0xc0] sm:$0xff]
    %v177 = vld [vmem:[#allocation10 + $0xc8] sm:$0xff]
    %v178 = vld [vmem:[#allocation10 + $0xd0] sm:$0xff]
    %v179 = vld [vmem:[#allocation10 + $0xd8] sm:$0xff]
    %v180 = vld [vmem:[#allocation10 + $0xe0] sm:$0xff]
    %v181 = vld [vmem:[#allocation10 + $0xe8] sm:$0xff]
    %v182 = vld [vmem:[#allocation10 + $0xf0] sm:$0xff]
    %v183 = vld [vmem:[#allocation10 + $0xf8] sm:$0xff]
    %v216 = vunpack.c.l.b16 %v152
    %v217 = vunpack.c.h.b16 %v152
    %v218 = vunpack.c.l.b16 %v153
    %v219 = vunpack.c.h.b16 %v153
    %v220 = vunpack.c.l.b16 %v154
    %v221 = vunpack.c.h.b16 %v154
    %v222 = vunpack.c.l.b16 %v155
    %v223 = vunpack.c.h.b16 %v155
    %v224 = vunpack.c.l.b16 %v156
    %v225 = vunpack.c.h.b16 %v156
    %v226 = vunpack.c.l.b16 %v157
    %v227 = vunpack.c.h.b16 %v157
    %v228 = vunpack.c.l.b16 %v158
    %v229 = vunpack.c.h.b16 %v158
    %v230 = vunpack.c.l.b16 %v159
    %v231 = vunpack.c.h.b16 %v159
    %v232 = vunpack.c.l.b16 %v160
    %v233 = vunpack.c.h.b16 %v160
    %v234 = vunpack.c.l.b16 %v161
    %v235 = vunpack.c.h.b16 %v161
    %v236 = vunpack.c.l.b16 %v162
    %v237 = vunpack.c.h.b16 %v162
    %v238 = vunpack.c.l.b16 %v163
    %v239 = vunpack.c.h.b16 %v163
    %v240 = vunpack.c.l.b16 %v164
    %v241 = vunpack.c.h.b16 %v164
    %v242 = vunpack.c.l.b16 %v165
    %v243 = vunpack.c.h.b16 %v165
    %v244 = vunpack.c.l.b16 %v166
    %v245 = vunpack.c.h.b16 %v166
    %v246 = vunpack.c.l.b16 %v167
    %v247 = vunpack.c.h.b16 %v167
    %v248 = vunpack.c.l.b16 %v168
    %v249 = vunpack.c.h.b16 %v168
    %v250 = vunpack.c.l.b16 %v169
    %v251 = vunpack.c.h.b16 %v169
    %v252 = vunpack.c.l.b16 %v170
    %v253 = vunpack.c.h.b16 %v170
    %v254 = vunpack.c.l.b16 %v171
    %v255 = vunpack.c.h.b16 %v171
    %v256 = vunpack.c.l.b16 %v172
    %v257 = vunpack.c.h.b16 %v172
    %v258 = vunpack.c.l.b16 %v173
    %v259 = vunpack.c.h.b16 %v173
    %v260 = vunpack.c.l.b16 %v174
    %v261 = vunpack.c.h.b16 %v174
    %v262 = vunpack.c.l.b16 %v175
    %v263 = vunpack.c.h.b16 %v175
    %v264 = vunpack.c.l.b16 %v176
    %v265 = vunpack.c.h.b16 %v176
    %v266 = vunpack.c.l.b16 %v177
    %v267 = vunpack.c.h.b16 %v177
    %v268 = vunpack.c.l.b16 %v178
    %v269 = vunpack.c.h.b16 %v178
    %v270 = vunpack.c.l.b16 %v179
    %v271 = vunpack.c.h.b16 %v179
    %v272 = vunpack.c.l.b16 %v180
    %v273 = vunpack.c.h.b16 %v180
    %v274 = vunpack.c.l.b16 %v181
    %v275 = vunpack.c.h.b16 %v181
    %v276 = vunpack.c.l.b16 %v182
    %v277 = vunpack.c.h.b16 %v182
    %v278 = vunpack.c.l.b16 %v183
    %v279 = vunpack.c.h.b16 %v183
    %v280 = vpack.c.b16 %v220, %v216
    %v281 = vpack.c.b16 %v221, %v217
    %v282 = vpack.c.b16 %v222, %v218
    %v283 = vpack.c.b16 %v223, %v219
    %v284 = vpack.c.b16 %v228, %v224
    %v285 = vpack.c.b16 %v229, %v225
    %v286 = vpack.c.b16 %v230, %v226
    %v287 = vpack.c.b16 %v231, %v227
    %v288 = vpack.c.b16 %v236, %v232
    %v289 = vpack.c.b16 %v237, %v233
    %v290 = vpack.c.b16 %v238, %v234
    %v291 = vpack.c.b16 %v239, %v235
    %v292 = vpack.c.b16 %v244, %v240
    %v293 = vpack.c.b16 %v245, %v241
    %v294 = vpack.c.b16 %v246, %v242
    %v295 = vpack.c.b16 %v247, %v243
    %v296 = vpack.c.b16 %v252, %v248
    %v297 = vpack.c.b16 %v253, %v249
    %v298 = vpack.c.b16 %v254, %v250
    %v299 = vpack.c.b16 %v255, %v251
    %v300 = vpack.c.b16 %v260, %v256
    %v301 = vpack.c.b16 %v261, %v257
    %v302 = vpack.c.b16 %v262, %v258
    %v303 = vpack.c.b16 %v263, %v259
    %v304 = vpack.c.b16 %v268, %v264
    %v305 = vpack.c.b16 %v269, %v265
    %v306 = vpack.c.b16 %v270, %v266
    %v307 = vpack.c.b16 %v271, %v267
    %v308 = vpack.c.b16 %v276, %v272
    %v309 = vpack.c.b16 %v277, %v273
    %v310 = vpack.c.b16 %v278, %v274
    %v311 = vpack.c.b16 %v279, %v275
    %344 = vmatpush.bf16.msra.mxu0 %v308
    %345 = vmatpush.bf16.msra.mxu0 %v304
    %346 = vmatpush.bf16.msra.mxu0 %v300
    %347 = vmatpush.bf16.msra.mxu0 %v296
    %348 = vmatpush.bf16.msra.mxu0 %v292
    %349 = vmatpush.bf16.msra.mxu0 %v288
    %350 = vmatpush.bf16.msra.mxu0 %v284
    %351 = vmatpush.bf16.msra.mxu0 %v280
    %352 = vmatmul.bf16.gmra.mxu0 %v151
    %v353 = vpop.f32.mrf.mxu0
    %v354 = vadd.f32 0.0, %v353
    %v355 = vpop.f32.mrf.mxu0
    %356 = vdwg.mxu0
    %357 = vmatpush.bf16.msra.mxu0 %v309
    %358 = vmatpush.bf16.msra.mxu0 %v305
    %359 = vmatpush.bf16.msra.mxu0 %v301
    %360 = vmatpush.bf16.msra.mxu0 %v297
    %361 = vmatpush.bf16.msra.mxu0 %v293
    %362 = vmatpush.bf16.msra.mxu0 %v289
    %363 = vmatpush.bf16.msra.mxu0 %v285
    %364 = vmatpush.bf16.msra.mxu0 %v281
    %365 = vmatmul.bf16.gmra.mxu0 %v151
    %v366 = vpop.f32.mrf.mxu0
    %v367 = vadd.f32 0.0, %v366
    %v368 = vpop.f32.mrf.mxu0
    %369 = vdwg.mxu0
    %370 = vmatpush.bf16.msra.mxu0 %v310
    %371 = vmatpush.bf16.msra.mxu0 %v306
    %372 = vmatpush.bf16.msra.mxu0 %v302
    %373 = vmatpush.bf16.msra.mxu0 %v298
    %374 = vmatpush.bf16.msra.mxu0 %v294
    %375 = vmatpush.bf16.msra.mxu0 %v290
    %376 = vmatpush.bf16.msra.mxu0 %v286
    %377 = vmatpush.bf16.msra.mxu0 %v282
    %378 = vmatmul.bf16.gmra.mxu0 %v151
    %v379 = vpop.f32.mrf.mxu0
    %v380 = vadd.f32 0.0, %v379
    %v381 = vpop.f32.mrf.mxu0
    %382 = vdwg.mxu0
    %383 = vmatpush.bf16.msra.mxu0 %v311
    %384 = vmatpush.bf16.msra.mxu0 %v307
    %385 = vmatpush.bf16.msra.mxu0 %v303
    %386 = vmatpush.bf16.msra.mxu0 %v299
    %387 = vmatpush.bf16.msra.mxu0 %v295
    %388 = vmatpush.bf16.msra.mxu0 %v291
    %389 = vmatpush.bf16.msra.mxu0 %v287
    %390 = vmatpush.bf16.msra.mxu0 %v283
    %391 = vmatmul.bf16.gmra.mxu0 %v151
    %v392 = vpop.f32.mrf.mxu0
    %v393 = vadd.f32 0.0, %v392
    %v394 = vpop.f32.mrf.mxu0
    %395 = vdwg.mxu0
    %v428 = vunpack.c.l.b16 %v119
    %v429 = vunpack.c.h.b16 %v119
    %v430 = vunpack.c.l.b16 %v120
    %v431 = vunpack.c.h.b16 %v120
    %v432 = vunpack.c.l.b16 %v121
    %v433 = vunpack.c.h.b16 %v121
    %v434 = vunpack.c.l.b16 %v122
    %v435 = vunpack.c.h.b16 %v122
    %v436 = vunpack.c.l.b16 %v123
    %v437 = vunpack.c.h.b16 %v123
    %v438 = vunpack.c.l.b16 %v124
    %v439 = vunpack.c.h.b16 %v124
    %v440 = vunpack.c.l.b16 %v125
    %v441 = vunpack.c.h.b16 %v125
    %v442 = vunpack.c.l.b16 %v126
    %v443 = vunpack.c.h.b16 %v126
    %v444 = vunpack.c.l.b16 %v127
    %v445 = vunpack.c.h.b16 %v127
    %v446 = vunpack.c.l.b16 %v128
    %v447 = vunpack.c.h.b16 %v128
    %v448 = vunpack.c.l.b16 %v129
    %v449 = vunpack.c.h.b16 %v129
    %v450 = vunpack.c.l.b16 %v130
    %v451 = vunpack.c.h.b16 %v130
    %v452 = vunpack.c.l.b16 %v131
    %v453 = vunpack.c.h.b16 %v131
    %v454 = vunpack.c.l.b16 %v132
    %v455 = vunpack.c.h.b16 %v132
    %v456 = vunpack.c.l.b16 %v133
    %v457 = vunpack.c.h.b16 %v133
    %v458 = vunpack.c.l.b16 %v134
    %v459 = vunpack.c.h.b16 %v134
    %v460 = vunpack.c.l.b16 %v135
    %v461 = vunpack.c.h.b16 %v135
    %v462 = vunpack.c.l.b16 %v136
    %v463 = vunpack.c.h.b16 %v136
    %v464 = vunpack.c.l.b16 %v137
    %v465 = vunpack.c.h.b16 %v137
    %v466 = vunpack.c.l.b16 %v138
    %v467 = vunpack.c.h.b16 %v138
    %v468 = vunpack.c.l.b16 %v139
    %v469 = vunpack.c.h.b16 %v139
    %v470 = vunpack.c.l.b16 %v140
    %v471 = vunpack.c.h.b16 %v140
    %v472 = vunpack.c.l.b16 %v141
    %v473 = vunpack.c.h.b16 %v141
    %v474 = vunpack.c.l.b16 %v142
    %v475 = vunpack.c.h.b16 %v142
    %v476 = vunpack.c.l.b16 %v143
    %v477 = vunpack.c.h.b16 %v143
    %v478 = vunpack.c.l.b16 %v144
    %v479 = vunpack.c.h.b16 %v144
    %v480 = vunpack.c.l.b16 %v145
    %v481 = vunpack.c.h.b16 %v145
    %v482 = vunpack.c.l.b16 %v146
    %v483 = vunpack.c.h.b16 %v146
    %v484 = vunpack.c.l.b16 %v147
    %v485 = vunpack.c.h.b16 %v147
    %v486 = vunpack.c.l.b16 %v148
    %v487 = vunpack.c.h.b16 %v148
    %v488 = vunpack.c.l.b16 %v149
    %v489 = vunpack.c.h.b16 %v149
    %v490 = vunpack.c.l.b16 %v150
    %v491 = vunpack.c.h.b16 %v150
    %v492 = vpack.c.b16 %v432, %v428
    %v493 = vpack.c.b16 %v433, %v429
    %v494 = vpack.c.b16 %v434, %v430
    %v495 = vpack.c.b16 %v435, %v431
    %v496 = vpack.c.b16 %v440, %v436
    %v497 = vpack.c.b16 %v441, %v437
    %v498 = vpack.c.b16 %v442, %v438
    %v499 = vpack.c.b16 %v443, %v439
    %v500 = vpack.c.b16 %v448, %v444
    %v501 = vpack.c.b16 %v449, %v445
    %v502 = vpack.c.b16 %v450, %v446
    %v503 = vpack.c.b16 %v451, %v447
    %v504 = vpack.c.b16 %v456, %v452
    %v505 = vpack.c.b16 %v457, %v453
    %v506 = vpack.c.b16 %v458, %v454
    %v507 = vpack.c.b16 %v459, %v455
    %v508 = vpack.c.b16 %v464, %v460
    %v509 = vpack.c.b16 %v465, %v461
    %v510 = vpack.c.b16 %v466, %v462
    %v511 = vpack.c.b16 %v467, %v463
    %v512 = vpack.c.b16 %v472, %v468
    %v513 = vpack.c.b16 %v473, %v469
    %v514 = vpack.c.b16 %v474, %v470
    %v515 = vpack.c.b16 %v475, %v471
    %v516 = vpack.c.b16 %v480, %v476
    %v517 = vpack.c.b16 %v481, %v477
    %v518 = vpack.c.b16 %v482, %v478
    %v519 = vpack.c.b16 %v483, %v479
    %v520 = vpack.c.b16 %v488, %v484
    %v521 = vpack.c.b16 %v489, %v485
    %v522 = vpack.c.b16 %v490, %v486
    %v523 = vpack.c.b16 %v491, %v487
    %556 = vmatpush.bf16.msra.mxu0 %v520
    %557 = vmatpush.bf16.msra.mxu0 %v516
    %558 = vmatpush.bf16.msra.mxu0 %v512
    %559 = vmatpush.bf16.msra.mxu0 %v508
    %560 = vmatpush.bf16.msra.mxu0 %v504
    %561 = vmatpush.bf16.msra.mxu0 %v500
    %562 = vmatpush.bf16.msra.mxu0 %v496
    %563 = vmatpush.bf16.msra.mxu0 %v492
    %564 = vmatmul.bf16.gmra.mxu0 %v118
    %v565 = vpop.f32.mrf.mxu0
    %v566 = vadd.f32 %v354, %v565
    %v567 = vpop.f32.mrf.mxu0
    %568 = vdwg.mxu0
    %569 = vmatpush.bf16.msra.mxu0 %v521
    %570 = vmatpush.bf16.msra.mxu0 %v517
    %571 = vmatpush.bf16.msra.mxu0 %v513
    %572 = vmatpush.bf16.msra.mxu0 %v509
    %573 = vmatpush.bf16.msra.mxu0 %v505
    %574 = vmatpush.bf16.msra.mxu0 %v501
    %575 = vmatpush.bf16.msra.mxu0 %v497
    %576 = vmatpush.bf16.msra.mxu0 %v493
    %577 = vmatmul.bf16.gmra.mxu0 %v118
    %v578 = vpop.f32.mrf.mxu0
    %v579 = vadd.f32 %v367, %v578
    %v580 = vpop.f32.mrf.mxu0
    %581 = vdwg.mxu0
    %582 = vmatpush.bf16.msra.mxu0 %v522
    %583 = vmatpush.bf16.msra.mxu0 %v518
    %584 = vmatpush.bf16.msra.mxu0 %v514
    %585 = vmatpush.bf16.msra.mxu0 %v510
    %586 = vmatpush.bf16.msra.mxu0 %v506
    %587 = vmatpush.bf16.msra.mxu0 %v502
    %588 = vmatpush.bf16.msra.mxu0 %v498
    %589 = vmatpush.bf16.msra.mxu0 %v494
    %590 = vmatmul.bf16.gmra.mxu0 %v118
    %v591 = vpop.f32.mrf.mxu0
    %v592 = vadd.f32 %v380, %v591
    %v593 = vpop.f32.mrf.mxu0
    %594 = vdwg.mxu0
    %595 = vmatpush.bf16.msra.mxu0 %v523
    %596 = vmatpush.bf16.msra.mxu0 %v519
    %597 = vmatpush.bf16.msra.mxu0 %v515
    %598 = vmatpush.bf16.msra.mxu0 %v511
    %599 = vmatpush.bf16.msra.mxu0 %v507
    %600 = vmatpush.bf16.msra.mxu0 %v503
    %601 = vmatpush.bf16.msra.mxu0 %v499
    %602 = vmatpush.bf16.msra.mxu0 %v495
    %603 = vmatmul.bf16.gmra.mxu0 %v118
    %v604 = vpop.f32.mrf.mxu0
    %v605 = vadd.f32 %v393, %v604
    %v606 = vpop.f32.mrf.mxu0
    %607 = vdwg.mxu0
    %v608 = vld [vmem:[%s5] sm:$0xf]
    %v610 = vperm.slane %v608, 0
    %v611 = vperm.slane %v608, 1
    %v612 = vperm.slane %v608, 2
    %v613 = vperm.slane %v608, 3
    %v618 = vadd.f32 %v566, %v610
    %v619 = vadd.f32 %v579, %v611
    %v620 = vadd.f32 %v592, %v612
    %v621 = vadd.f32 %v605, %v613
    %v622 = vxor.u32 %v618, 2147483648
    %v623 = vmul.f32 %v622, 1.442695
    %v624 = vpow.pop %v623
    %v625 = vadd.f32 %v624, 1.0
    %v626 = vrcp.pop %v625
    %v627 = vmul.f32 %v625, %v626
    %v628 = vsub.f32 1.0, %v627
    %v629 = vmul.f32 %v626, %v628
    %v630 = vadd.f32 %v626, %v629
    %vm631 = vweird.f32 %v625
    %vm632 = vweird.f32 %v626
    %vm633 = vmor %vm631, %vm632
    %v634 = vsel %vm633, %v626, %v630
    %v635 = vand.u32 2147483647, %v625
    %vm636 = vcmp.eq.f32.partialorder %v635, 8.507059e+37
    %v637 = vand.u32 %v625, 2147483648
    %v638 = vor.u32 1.1754944e-38, %v637
    %v639 = vsel %vm636, %v638, %v634
    %v640 = vmul.f32 1.0, %v639
    %v641 = vxor.u32 %v619, 2147483648
    %v642 = vmul.f32 %v641, 1.442695
    %v643 = vpow.pop %v642
    %v644 = vadd.f32 %v643, 1.0
    %v645 = vrcp.pop %v644
    %v646 = vmul.f32 %v644, %v645
    %v647 = vsub.f32 1.0, %v646
    %v648 = vmul.f32 %v645, %v647
    %v649 = vadd.f32 %v645, %v648
    %vm650 = vweird.f32 %v644
    %vm651 = vweird.f32 %v645
    %vm652 = vmor %vm650, %vm651
    %v653 = vsel %vm652, %v645, %v649
    %v654 = vand.u32 2147483647, %v644
    %vm655 = vcmp.eq.f32.partialorder %v654, 8.507059e+37
    %v656 = vand.u32 %v644, 2147483648
    %v657 = vor.u32 1.1754944e-38, %v656
    %v658 = vsel %vm655, %v657, %v653
    %v659 = vmul.f32 1.0, %v658
    %v660 = vtanh.pop %v620
    %v661 = vxor.u32 %v621, 2147483648
    %v662 = vmul.f32 %v661, 1.442695
    %v663 = vpow.pop %v662
    %v664 = vadd.f32 %v663, 1.0
    %v665 = vrcp.pop %v664
    %v666 = vmul.f32 %v664, %v665
    %v667 = vsub.f32 1.0, %v666
    %v668 = vmul.f32 %v665, %v667
    %v669 = vadd.f32 %v665, %v668
    %vm670 = vweird.f32 %v664
    %vm671 = vweird.f32 %v665
    %vm672 = vmor %vm670, %vm671
    %v673 = vsel %vm672, %v665, %v669
    %v674 = vand.u32 2147483647, %v664
    %vm675 = vcmp.eq.f32.partialorder %v674, 8.507059e+37
    %v676 = vand.u32 %v664, 2147483648
    %v677 = vor.u32 1.1754944e-38, %v676
    %v678 = vsel %vm675, %v677, %v673
    %v679 = vmul.f32 1.0, %v678
    %v680 = vmul.f32 %v659, %v117
    %v681 = vmul.f32 %v640, %v660
    %v682 = vadd.f32 %v680, %v681
    %v683 = vtanh.pop %v682
    %v684 = vmul.f32 %v679, %v683
    %685 = vst [vmem:[#allocation3] sm:$0xff] %v682
    %686 = vst [vmem:[#allocation2] sm:$0xff] %v684
    %v687 = vpack.c.bf16 %v684, %v684
    %v688 = vld [vmem:[#allocation12] sm:$0xf]
    %v689 = vld [vmem:[#allocation12 + $0x4] sm:$0xf]
    %v690 = vld [vmem:[#allocation12 + $0x8] sm:$0xf]
    %v691 = vld [vmem:[#allocation12 + $0xc] sm:$0xf]
    %v692 = vld [vmem:[#allocation12 + $0x10] sm:$0xf]
    %v693 = vld [vmem:[#allocation12 + $0x14] sm:$0xf]
    %v694 = vld [vmem:[#allocation12 + $0x18] sm:$0xf]
    %v695 = vld [vmem:[#allocation12 + $0x1c] sm:$0xf]
    %v696 = vld [vmem:[#allocation12 + $0x20] sm:$0xf]
    %v697 = vld [vmem:[#allocation12 + $0x24] sm:$0xf]
    %v698 = vld [vmem:[#allocation12 + $0x28] sm:$0xf]
    %v699 = vld [vmem:[#allocation12 + $0x2c] sm:$0xf]
    %v700 = vld [vmem:[#allocation12 + $0x30] sm:$0xf]
    %v701 = vld [vmem:[#allocation12 + $0x34] sm:$0xf]
    %v702 = vld [vmem:[#allocation12 + $0x38] sm:$0xf]
    %v703 = vld [vmem:[#allocation12 + $0x3c] sm:$0xf]
    %v704 = vld [vmem:[%s7] sm:$0x1]
    %v706 = vperm.slane %v704, 0
    %v724 = vunpack.c.l.b16 %v688
    %v725 = vunpack.c.l.b16 %v689
    %v726 = vunpack.c.l.b16 %v690
    %v727 = vunpack.c.l.b16 %v691
    %v728 = vunpack.c.l.b16 %v692
    %v729 = vunpack.c.l.b16 %v693
    %v730 = vunpack.c.l.b16 %v694
    %v731 = vunpack.c.l.b16 %v695
    %v732 = vunpack.c.l.b16 %v696
    %v733 = vunpack.c.l.b16 %v697
    %v734 = vunpack.c.l.b16 %v698
    %v735 = vunpack.c.l.b16 %v699
    %v736 = vunpack.c.l.b16 %v700
    %v737 = vunpack.c.l.b16 %v701
    %v738 = vunpack.c.l.b16 %v702
    %v739 = vunpack.c.l.b16 %v703
    %v740 = vpack.c.b16 %v725, %v724
    %v741 = vpack.c.b16 %v727, %v726
    %v742 = vpack.c.b16 %v729, %v728
    %v743 = vpack.c.b16 %v731, %v730
    %v744 = vpack.c.b16 %v733, %v732
    %v745 = vpack.c.b16 %v735, %v734
    %v746 = vpack.c.b16 %v737, %v736
    %v747 = vpack.c.b16 %v739, %v738
    %756 = vmatpush.bf16.msra.mxu0 %v747
    %757 = vmatpush.bf16.msra.mxu0 %v746
    %758 = vmatpush.bf16.msra.mxu0 %v745
    %759 = vmatpush.bf16.msra.mxu0 %v744
    %760 = vmatpush.bf16.msra.mxu0 %v743
    %761 = vmatpush.bf16.msra.mxu0 %v742
    %762 = vmatpush.bf16.msra.mxu0 %v741
    %763 = vmatpush.bf16.msra.mxu0 %v740
    %764 = vmatmul.bf16.gmra.mxu0 %v687
    %v765 = vpop.f32.mrf.mxu0
    %v766 = vadd.f32 %v706, %v765
    %v767 = vpop.f32.mrf.mxu0
    %768 = vdwg.mxu0
    %769 = vst [vmem:[#allocation13] sm:$0xff] %v766
    // Predicated region
    $region58: #{tpu_custom_call.1} parent=1 // pred_check
      %p770 = pneg %p108
    $region59: #{tpu_custom_call.1} parent=1 // pred_check_branch
      %772 = sbr.rel (%p770) target = $region61
    $region60: #{tpu_custom_call.1} parent=1 // pred_region
      %773 = vst [vmem:[#allocation14] sm:$0xff] %v684
      %774 = vst [vmem:[#allocation16] sm:$0xff] %v682
    $region61: #{tpu_custom_call.1} parent=1 // pred_fallthru
      _
    // Predicated region
    $region62: #{tpu_custom_call.1} parent=1 // pred_check
      _
    $region63: #{tpu_custom_call.1} parent=1 // pred_check_branch
      %776 = sbr.rel (0) target = $region65
    $region64: #{tpu_custom_call.1} parent=1 // pred_region
      %778 = vsyncadd [#allocation6], 0
      %s780 = sshll.u32 [#allocation13], 4
      %s781 = int_to_ptr.vmem [resolvable:$true] %s780
      %s782 = sshll.u32 %s8, 4
      %s783 = int_to_ptr.hbm [resolvable:$true] %s782
      %785 = dma.vmem_to_hbm [thread:$0]  %s781, 128, %s783, [#allocation6]
    $region65: #{tpu_custom_call.1} parent=1 // pred_fallthru
      _
    // Predicated region
    $region66: #{tpu_custom_call.1} parent=1 // pred_check
      _
    $region67: #{tpu_custom_call.1} parent=1 // pred_check_branch
      %787 = sbr.rel (0) target = $region69
    $region68: #{tpu_custom_call.1} parent=1 // pred_region
      %789 = vsyncadd [#allocation15], 0
      %s791 = sshll.u32 [#allocation14], 4
      %s792 = int_to_ptr.vmem [resolvable:$true] %s791
      %s793 = sshll.u32 %s9, 4
      %s794 = int_to_ptr.hbm [resolvable:$true] %s793
      %796 = dma.vmem_to_hbm [thread:$0]  %s792, 128, %s794, [#allocation15]
    $region69: #{tpu_custom_call.1} parent=1 // pred_fallthru
      _
    // Predicated region
    $region70: #{tpu_custom_call.1} parent=1 // pred_check
      _
    $region71: #{tpu_custom_call.1} parent=1 // pred_check_branch
      %798 = sbr.rel (0) target = $region73
    $region72: #{tpu_custom_call.1} parent=1 // pred_region
      %800 = vsyncadd [#allocation15], 0
      %s802 = sshll.u32 [#allocation16], 4
      %s803 = int_to_ptr.vmem [resolvable:$true] %s802
      %s804 = sshll.u32 %s10, 4
      %s805 = int_to_ptr.hbm [resolvable:$true] %s804
      %807 = dma.vmem_to_hbm [thread:$0]  %s803, 128, %s805, [#allocation15]
    $region73: #{tpu_custom_call.1} parent=1 // pred_fallthru
      _
    // Predicated region
    $region74: #{tpu_custom_call.1} parent=1 // pred_check
      _
    $region75: #{tpu_custom_call.1} parent=1 // pred_check_branch
      %809 = sbr.rel (0) target = $region77
    $region76: #{tpu_custom_call.1} parent=1 // pred_region
      %811 = dma.done [#allocation6], 128
    $region77: #{tpu_custom_call.1} parent=1 // pred_fallthru
      _
    // Predicated region
    $region78: #{tpu_custom_call.1} parent=1 // pred_check
      _
    $region79: #{tpu_custom_call.1} parent=1 // pred_check_branch
      %813 = sbr.rel (0) target = $region81
    $region80: #{tpu_custom_call.1} parent=1 // pred_region
      %815 = dma.done [#allocation15], 128
    $region81: #{tpu_custom_call.1} parent=1 // pred_fallthru
      _
    // Predicated region
    $region82: #{tpu_custom_call.1} parent=1 // pred_check
      _
    $region83: #{tpu_custom_call.1} parent=1 // pred_check_branch
      %817 = sbr.rel (0) target = $region85
    $region84: #{tpu_custom_call.1} parent=1 // pred_region
      %819 = dma.done [#allocation15], 128
    $region85: #{tpu_custom_call.1} parent=1 // pred_fallthru
      _
    %820 = vsyncpa [#allocation5], 1
    %821 = vsyncpa [#allocation8], 1
    %822 = vsyncpa [#allocation11], 1
    %823 = vsyncpa [#allocation6], 1
    %824 = vsyncpa [#allocation15], 1

</llo_original>
